<compile_context>
chip_gen: v5e
topology: v5e:2x2
jax: 0.10.0
libtpu: 0.0.40
codegen_flags: <defaults>
</compile_context>

<pallas_src>
import functools

import numpy as np
import jax
import jax.numpy as jnp
from jax.experimental import pallas as pl
from jax.experimental.pallas import tpu as pltpu


# ---------------------------------------------------------------------------
# Fused Conv3d(Cin, 1, (1,3,3), stride 1, pad 0) kernel.
# Grid: (N, D, num_channel_blocks); channel blocks are the reduction axis.
# ---------------------------------------------------------------------------
def _conv_1x3x3_kernel(x_ref, w_ref, b_ref, o_ref, acc_ref, *, tc):
    # x_ref  : (tc, H, W)   VMEM block — `tc` input channels of one (n, d) slice
    # w_ref  : (Cin * 9,)   SMEM — full flattened weight, w[c*9 + kh*3 + kw]
    # b_ref  : (1,)         SMEM — bias
    # o_ref  : (Ho, Wo)     VMEM output tile (Ho = H-2, Wo = W-2)
    # acc_ref: (Ho, Wo) f32 VMEM scratch accumulator (lives across channel blocks)
    Ho, Wo = o_ref.shape
    cb = pl.program_id(2)
    ncb = pl.num_programs(2)

    @pl.when(cb == 0)
    def _():
        acc_ref[...] = jnp.zeros_like(acc_ref)

    acc = acc_ref[...]
    base = cb * (tc * 9)  # offset of this channel block inside the flat weight
    for c in range(tc):
        # One lane-dense load of the full (H, W) channel slab; the 9 stencil
        # taps are cheap in-register shifts of it.
        xc = x_ref[c].astype(jnp.float32)                     # (H, W)
        for kh in range(3):
            for kw in range(3):
                wv = w_ref[base + c * 9 + kh * 3 + kw]        # scalar from SMEM
                acc = acc + xc[kh:kh + Ho, kw:kw + Wo] * wv   # VPU FMA on full tile
    acc_ref[...] = acc

    @pl.when(cb == ncb - 1)
    def _():
        # Bias added exactly once; single lane-dense store of the whole tile.
        o_ref[...] = (acc + b_ref[0]).astype(o_ref.dtype)


def _pick_channel_tile(cin, max_tc=8):
    """Largest divisor of cin that is <= max_tc (bounds in-kernel unroll)."""
    for tc in range(min(cin, max_tc), 0, -1):
        if cin % tc == 0:
            return tc
    return 1


def conv3d_1x3x3(x, w, b, *, max_channel_tile=8):
    """x: (N, Cin, D, H, W); w: (1, Cin, 1, 3, 3); b: (1,) -> (N, 1, D, H-2, W-2)."""
    N, Cin, D, H, W = x.shape
    assert w.shape == (1, Cin, 1, 3, 3) and b.shape == (1,)
    Ho, Wo = H - 2, W - 2
    tc = _pick_channel_tile(Cin, max_channel_tile)
    ncb = Cin // tc

    # Flatten weights so the kernel reads them as scalars from SMEM:
    # w_flat[c*9 + kh*3 + kw] == w[0, c, 0, kh, kw]
    w_flat = w[0, :, 0, :, :].reshape(Cin * 9)

    kern = functools.partial(_conv_1x3x3_kernel, tc=tc)
    return pl.pallas_call(
        kern,
        out_shape=jax.ShapeDtypeStruct((N, 1, D, Ho, Wo), x.dtype),
        grid=(N, D, ncb),
        in_specs=[
            # (tc, H, W) channel-block slab of one (n, d) slice, straight from NCDHW.
            pl.BlockSpec((None, tc, None, H, W), lambda n, d, cb: (n, cb, d, 0, 0)),
            # Whole flattened weight / bias live in SMEM (scalar reads in-kernel).
            pl.BlockSpec(memory_space=pltpu.MemorySpace.SMEM),
            pl.BlockSpec(memory_space=pltpu.MemorySpace.SMEM),
        ],
        # Output block is revisited across the channel axis (accumulator pattern).
        out_specs=pl.BlockSpec((None, None, None, Ho, Wo), lambda n, d, cb: (n, 0, d, 0, 0)),
        scratch_shapes=[pltpu.VMEM((Ho, Wo), jnp.float32)],
        compiler_params=pltpu.CompilerParams(
            dimension_semantics=("parallel", "parallel", "arbitrary")),
    )(x, w_flat, b)


# ---------------------------------------------------------------------------
# _unet_out equivalent (defaults: Conv3d(Cin, 1, (1,3,3), stride 1, pad 0)).
# ---------------------------------------------------------------------------
class UNetOutPallas:
    def __init__(self, num_input_channels, key,
                 conv3d_kernel=(1, 3, 3), conv3d_stride=(1, 1, 1), conv3d_padding=(0, 0, 0)):
        assert conv3d_kernel == (1, 3, 3)
        assert conv3d_stride == (1, 1, 1)
        assert conv3d_padding == (0, 0, 0)
        cin = num_input_channels
        k1, k2 = jax.random.split(key)
        # PyTorch Conv3d default init: U(-1/sqrt(fan_in), 1/sqrt(fan_in))
        bnd = 1.0 / float(np.sqrt(cin * 1 * 3 * 3))
        self.w = jax.random.uniform(k1, (1, cin, 1, 3, 3), jnp.float32, -bnd, bnd)
        self.b = jax.random.uniform(k2, (1,), jnp.float32, -bnd, bnd)
        self.cin = cin

    def __call__(self, x):
        # x: (N, Cin, D, H, W)  ->  (N, 1, D, H-2, W-2)
        return conv3d_1x3x3(x, self.w, self.b)


# Pure-numpy reference (f64 accumulation) for correctness checking.
def _conv_ref_np(x, w, b):
    xn = np.asarray(x, np.float64)
    wn = np.asarray(w, np.float64)
    bn = np.asarray(b, np.float64)
    N, Cin, D, H, W = xn.shape
    Ho, Wo = H - 2, W - 2
    out = np.zeros((N, 1, D, Ho, Wo), np.float64)
    for kh in range(3):
        for kw in range(3):
            out[:, 0] += np.einsum(
                "ncdhw,c->ndhw", xn[:, :, :, kh:kh + Ho, kw:kw + Wo], wn[0, :, 0, kh, kw])
    out += bn[0]
    return out.astype(np.float32)


if __name__ == "__main__":
    key = jax.random.PRNGKey(0)
    kx, kp = jax.random.split(key)

    N, Cin, D, H, W = 2, 4, 3, 16, 16
    x = jax.random.normal(kx, (N, Cin, D, H, W), jnp.float32)

    module = UNetOutPallas(Cin, kp)
    out = jax.block_until_ready(module(x))

    assert out.shape == (N, 1, D, H - 2, W - 2), out.shape
    assert bool(jnp.all(jnp.isfinite(out)))

    ref = _conv_ref_np(x, module.w, module.b)
    assert np.allclose(np.asarray(out), ref, rtol=1e-4, atol=1e-4), \
        float(np.max(np.abs(np.asarray(out) - ref)))

    print("KERNEL_OK")
</pallas_src>

<mosaic_0001>
module attributes {stable_mosaic.version = 11 : i64} {
  func.func @_conv_1x3x3_kernel(%arg0: i32, %arg1: i32, %arg2: i32, %arg3: memref<1x4x1x16x16xf32, #tpu.memory_space<vmem>>, %arg4: memref<36xf32, #tpu.memory_space<smem>>, %arg5: memref<1xf32, #tpu.memory_space<smem>>, %arg6: memref<1x1x1x14x14xf32, #tpu.memory_space<vmem>>, %arg7: memref<14x14xf32, #tpu.memory_space<vmem>>) attributes {dimension_semantics = [#tpu.dimension_semantics<parallel>, #tpu.dimension_semantics<parallel>, #tpu.dimension_semantics<arbitrary>], iteration_bounds = array<i64: 2, 3, 1>, scalar_prefetch = 0 : i64, scratch_operands = 1 : i64, tpu.core_type = #tpu.core_type<tc>, window_params = [{transform_indices = @transform_0, window_bounds = array<i64: 1, 4, 1, 16, 16>}, {transform_indices = @transform_1, window_bounds = array<i64: 36>}, {transform_indices = @transform_2, window_bounds = array<i64: 1>}, {transform_indices = @transform_3, window_bounds = array<i64: 1, 1, 1, 14, 14>}]} {
    %c0_i32 = arith.constant 0 : i32
    %0 = arith.cmpi eq, %arg2, %c0_i32 : i32
    %1 = arith.extui %0 : i1 to i32
    %c0_i32_0 = arith.constant 0 : i32
    %2 = arith.cmpi ne, %1, %c0_i32_0 : i32
    scf.if %2 {
      %cst = arith.constant 0.000000e+00 : f32
      %341 = vector.broadcast %cst : f32 to vector<14x14xf32>
      %c0_124 = arith.constant 0 : index
      %c0_125 = arith.constant 0 : index
      %342 = vector.load %arg7[%c0_124, %c0_125] : memref<14x14xf32, #tpu.memory_space<vmem>>, vector<14x14xf32>
      tpu.vector_store %arg7[%c0_124, %c0_125], %341 {strides = array<i32>} : memref<14x14xf32, #tpu.memory_space<vmem>>, vector<14x14xf32>,
    } else {
    }
    %c0 = arith.constant 0 : index
    %c0_1 = arith.constant 0 : index
    %3 = vector.load %arg7[%c0, %c0_1] : memref<14x14xf32, #tpu.memory_space<vmem>>, vector<14x14xf32>
    %c36_i32 = arith.constant 36 : i32
    %4 = arith.muli %arg2, %c36_i32 : i32
    %c0_2 = arith.constant 0 : index
    %c0_3 = arith.constant 0 : index
    %c0_4 = arith.constant 0 : index
    %c0_5 = arith.constant 0 : index
    %c0_6 = arith.constant 0 : index
    %5 = vector.load %arg3[%c0_2, %c0_3, %c0_4, %c0_5, %c0_6] : memref<1x4x1x16x16xf32, #tpu.memory_space<vmem>>, vector<1x1x1x16x16xf32>
    %6 = vector.shape_cast %5 : vector<1x1x1x16x16xf32> to vector<16x16xf32>
    %c0_i32_7 = arith.constant 0 : i32
    %7 = arith.addi %4, %c0_i32_7 : i32
    %c0_i32_8 = arith.constant 0 : i32
    %8 = arith.addi %7, %c0_i32_8 : i32
    %c0_i32_9 = arith.constant 0 : i32
    %9 = arith.addi %8, %c0_i32_9 : i32
    %10 = arith.index_cast %9 : i32 to index
    %11 = memref.load %arg4[%10] : memref<36xf32, #tpu.memory_space<smem>>
    %12 = vector.extract_strided_slice %6 {offsets = [0, 0], sizes = [14, 14], strides = [1, 1]} : vector<16x16xf32> to vector<14x14xf32>
    %13 = vector.broadcast %11 : f32 to vector<14x14xf32>
    %14 = arith.mulf %12, %13 : vector<14x14xf32>
    %15 = arith.addf %3, %14 : vector<14x14xf32>
    %c0_i32_10 = arith.constant 0 : i32
    %16 = arith.addi %4, %c0_i32_10 : i32
    %c0_i32_11 = arith.constant 0 : i32
    %17 = arith.addi %16, %c0_i32_11 : i32
    %c1_i32 = arith.constant 1 : i32
    %18 = arith.addi %17, %c1_i32 : i32
    %19 = arith.index_cast %18 : i32 to index
    %20 = memref.load %arg4[%19] : memref<36xf32, #tpu.memory_space<smem>>
    %21 = vector.extract_strided_slice %6 {offsets = [0, 1], sizes = [14, 14], strides = [1, 1]} : vector<16x16xf32> to vector<14x14xf32>
    %22 = vector.broadcast %20 : f32 to vector<14x14xf32>
    %23 = arith.mulf %21, %22 : vector<14x14xf32>
    %24 = arith.addf %15, %23 : vector<14x14xf32>
    %c0_i32_12 = arith.constant 0 : i32
    %25 = arith.addi %4, %c0_i32_12 : i32
    %c0_i32_13 = arith.constant 0 : i32
    %26 = arith.addi %25, %c0_i32_13 : i32
    %c2_i32 = arith.constant 2 : i32
    %27 = arith.addi %26, %c2_i32 : i32
    %28 = arith.index_cast %27 : i32 to index
    %29 = memref.load %arg4[%28] : memref<36xf32, #tpu.memory_space<smem>>
    %30 = vector.extract_strided_slice %6 {offsets = [0, 2], sizes = [14, 14], strides = [1, 1]} : vector<16x16xf32> to vector<14x14xf32>
    %31 = vector.broadcast %29 : f32 to vector<14x14xf32>
    %32 = arith.mulf %30, %31 : vector<14x14xf32>
    %33 = arith.addf %24, %32 : vector<14x14xf32>
    %c0_i32_14 = arith.constant 0 : i32
    %34 = arith.addi %4, %c0_i32_14 : i32
    %c3_i32 = arith.constant 3 : i32
    %35 = arith.addi %34, %c3_i32 : i32
    %c0_i32_15 = arith.constant 0 : i32
    %36 = arith.addi %35, %c0_i32_15 : i32
    %37 = arith.index_cast %36 : i32 to index
    %38 = memref.load %arg4[%37] : memref<36xf32, #tpu.memory_space<smem>>
    %39 = vector.extract_strided_slice %6 {offsets = [1, 0], sizes = [14, 14], strides = [1, 1]} : vector<16x16xf32> to vector<14x14xf32>
    %40 = vector.broadcast %38 : f32 to vector<14x14xf32>
    %41 = arith.mulf %39, %40 : vector<14x14xf32>
    %42 = arith.addf %33, %41 : vector<14x14xf32>
    %c0_i32_16 = arith.constant 0 : i32
    %43 = arith.addi %4, %c0_i32_16 : i32
    %c3_i32_17 = arith.constant 3 : i32
    %44 = arith.addi %43, %c3_i32_17 : i32
    %c1_i32_18 = arith.constant 1 : i32
    %45 = arith.addi %44, %c1_i32_18 : i32
    %46 = arith.index_cast %45 : i32 to index
    %47 = memref.load %arg4[%46] : memref<36xf32, #tpu.memory_space<smem>>
    %48 = vector.extract_strided_slice %6 {offsets = [1, 1], sizes = [14, 14], strides = [1, 1]} : vector<16x16xf32> to vector<14x14xf32>
    %49 = vector.broadcast %47 : f32 to vector<14x14xf32>
    %50 = arith.mulf %48, %49 : vector<14x14xf32>
    %51 = arith.addf %42, %50 : vector<14x14xf32>
    %c0_i32_19 = arith.constant 0 : i32
    %52 = arith.addi %4, %c0_i32_19 : i32
    %c3_i32_20 = arith.constant 3 : i32
    %53 = arith.addi %52, %c3_i32_20 : i32
    %c2_i32_21 = arith.constant 2 : i32
    %54 = arith.addi %53, %c2_i32_21 : i32
    %55 = arith.index_cast %54 : i32 to index
    %56 = memref.load %arg4[%55] : memref<36xf32, #tpu.memory_space<smem>>
    %57 = vector.extract_strided_slice %6 {offsets = [1, 2], sizes = [14, 14], strides = [1, 1]} : vector<16x16xf32> to vector<14x14xf32>
    %58 = vector.broadcast %56 : f32 to vector<14x14xf32>
    %59 = arith.mulf %57, %58 : vector<14x14xf32>
    %60 = arith.addf %51, %59 : vector<14x14xf32>
    %c0_i32_22 = arith.constant 0 : i32
    %61 = arith.addi %4, %c0_i32_22 : i32
    %c6_i32 = arith.constant 6 : i32
    %62 = arith.addi %61, %c6_i32 : i32
    %c0_i32_23 = arith.constant 0 : i32
    %63 = arith.addi %62, %c0_i32_23 : i32
    %64 = arith.index_cast %63 : i32 to index
    %65 = memref.load %arg4[%64] : memref<36xf32, #tpu.memory_space<smem>>
    %66 = vector.extract_strided_slice %6 {offsets = [2, 0], sizes = [14, 14], strides = [1, 1]} : vector<16x16xf32> to vector<14x14xf32>
    %67 = vector.broadcast %65 : f32 to vector<14x14xf32>
    %68 = arith.mulf %66, %67 : vector<14x14xf32>
    %69 = arith.addf %60, %68 : vector<14x14xf32>
    %c0_i32_24 = arith.constant 0 : i32
    %70 = arith.addi %4, %c0_i32_24 : i32
    %c6_i32_25 = arith.constant 6 : i32
    %71 = arith.addi %70, %c6_i32_25 : i32
    %c1_i32_26 = arith.constant 1 : i32
    %72 = arith.addi %71, %c1_i32_26 : i32
    %73 = arith.index_cast %72 : i32 to index
    %74 = memref.load %arg4[%73] : memref<36xf32, #tpu.memory_space<smem>>
    %75 = vector.extract_strided_slice %6 {offsets = [2, 1], sizes = [14, 14], strides = [1, 1]} : vector<16x16xf32> to vector<14x14xf32>
    %76 = vector.broadcast %74 : f32 to vector<14x14xf32>
    %77 = arith.mulf %75, %76 : vector<14x14xf32>
    %78 = arith.addf %69, %77 : vector<14x14xf32>
    %c0_i32_27 = arith.constant 0 : i32
    %79 = arith.addi %4, %c0_i32_27 : i32
    %c6_i32_28 = arith.constant 6 : i32
    %80 = arith.addi %79, %c6_i32_28 : i32
    %c2_i32_29 = arith.constant 2 : i32
    %81 = arith.addi %80, %c2_i32_29 : i32
    %82 = arith.index_cast %81 : i32 to index
    %83 = memref.load %arg4[%82] : memref<36xf32, #tpu.memory_space<smem>>
    %84 = vector.extract_strided_slice %6 {offsets = [2, 2], sizes = [14, 14], strides = [1, 1]} : vector<16x16xf32> to vector<14x14xf32>
    %85 = vector.broadcast %83 : f32 to vector<14x14xf32>
    %86 = arith.mulf %84, %85 : vector<14x14xf32>
    %87 = arith.addf %78, %86 : vector<14x14xf32>
    %c0_30 = arith.constant 0 : index
    %c1 = arith.constant 1 : index
    %c0_31 = arith.constant 0 : index
    %c0_32 = arith.constant 0 : index
    %c0_33 = arith.constant 0 : index
    %88 = vector.load %arg3[%c0_30, %c1, %c0_31, %c0_32, %c0_33] : memref<1x4x1x16x16xf32, #tpu.memory_space<vmem>>, vector<1x1x1x16x16xf32>
    %89 = vector.shape_cast %88 : vector<1x1x1x16x16xf32> to vector<16x16xf32>
    %c9_i32 = arith.constant 9 : i32
    %90 = arith.addi %4, %c9_i32 : i32
    %c0_i32_34 = arith.constant 0 : i32
    %91 = arith.addi %90, %c0_i32_34 : i32
    %c0_i32_35 = arith.constant 0 : i32
    %92 = arith.addi %91, %c0_i32_35 : i32
    %93 = arith.index_cast %92 : i32 to index
    %94 = memref.load %arg4[%93] : memref<36xf32, #tpu.memory_space<smem>>
    %95 = vector.extract_strided_slice %89 {offsets = [0, 0], sizes = [14, 14], strides = [1, 1]} : vector<16x16xf32> to vector<14x14xf32>
    %96 = vector.broadcast %94 : f32 to vector<14x14xf32>
    %97 = arith.mulf %95, %96 : vector<14x14xf32>
    %98 = arith.addf %87, %97 : vector<14x14xf32>
    %c9_i32_36 = arith.constant 9 : i32
    %99 = arith.addi %4, %c9_i32_36 : i32
    %c0_i32_37 = arith.constant 0 : i32
    %100 = arith.addi %99, %c0_i32_37 : i32
    %c1_i32_38 = arith.constant 1 : i32
    %101 = arith.addi %100, %c1_i32_38 : i32
    %102 = arith.index_cast %101 : i32 to index
    %103 = memref.load %arg4[%102] : memref<36xf32, #tpu.memory_space<smem>>
    %104 = vector.extract_strided_slice %89 {offsets = [0, 1], sizes = [14, 14], strides = [1, 1]} : vector<16x16xf32> to vector<14x14xf32>
    %105 = vector.broadcast %103 : f32 to vector<14x14xf32>
    %106 = arith.mulf %104, %105 : vector<14x14xf32>
    %107 = arith.addf %98, %106 : vector<14x14xf32>
    %c9_i32_39 = arith.constant 9 : i32
    %108 = arith.addi %4, %c9_i32_39 : i32
    %c0_i32_40 = arith.constant 0 : i32
    %109 = arith.addi %108, %c0_i32_40 : i32
    %c2_i32_41 = arith.constant 2 : i32
    %110 = arith.addi %109, %c2_i32_41 : i32
    %111 = arith.index_cast %110 : i32 to index
    %112 = memref.load %arg4[%111] : memref<36xf32, #tpu.memory_space<smem>>
    %113 = vector.extract_strided_slice %89 {offsets = [0, 2], sizes = [14, 14], strides = [1, 1]} : vector<16x16xf32> to vector<14x14xf32>
    %114 = vector.broadcast %112 : f32 to vector<14x14xf32>
    %115 = arith.mulf %113, %114 : vector<14x14xf32>
    %116 = arith.addf %107, %115 : vector<14x14xf32>
    %c9_i32_42 = arith.constant 9 : i32
    %117 = arith.addi %4, %c9_i32_42 : i32
    %c3_i32_43 = arith.constant 3 : i32
    %118 = arith.addi %117, %c3_i32_43 : i32
    %c0_i32_44 = arith.constant 0 : i32
    %119 = arith.addi %118, %c0_i32_44 : i32
    %120 = arith.index_cast %119 : i32 to index
    %121 = memref.load %arg4[%120] : memref<36xf32, #tpu.memory_space<smem>>
    %122 = vector.extract_strided_slice %89 {offsets = [1, 0], sizes = [14, 14], strides = [1, 1]} : vector<16x16xf32> to vector<14x14xf32>
    %123 = vector.broadcast %121 : f32 to vector<14x14xf32>
    %124 = arith.mulf %122, %123 : vector<14x14xf32>
    %125 = arith.addf %116, %124 : vector<14x14xf32>
    %c9_i32_45 = arith.constant 9 : i32
    %126 = arith.addi %4, %c9_i32_45 : i32
    %c3_i32_46 = arith.constant 3 : i32
    %127 = arith.addi %126, %c3_i32_46 : i32
    %c1_i32_47 = arith.constant 1 : i32
    %128 = arith.addi %127, %c1_i32_47 : i32
    %129 = arith.index_cast %128 : i32 to index
    %130 = memref.load %arg4[%129] : memref<36xf32, #tpu.memory_space<smem>>
    %131 = vector.extract_strided_slice %89 {offsets = [1, 1], sizes = [14, 14], strides = [1, 1]} : vector<16x16xf32> to vector<14x14xf32>
    %132 = vector.broadcast %130 : f32 to vector<14x14xf32>
    %133 = arith.mulf %131, %132 : vector<14x14xf32>
    %134 = arith.addf %125, %133 : vector<14x14xf32>
    %c9_i32_48 = arith.constant 9 : i32
    %135 = arith.addi %4, %c9_i32_48 : i32
    %c3_i32_49 = arith.constant 3 : i32
    %136 = arith.addi %135, %c3_i32_49 : i32
    %c2_i32_50 = arith.constant 2 : i32
    %137 = arith.addi %136, %c2_i32_50 : i32
    %138 = arith.index_cast %137 : i32 to index
    %139 = memref.load %arg4[%138] : memref<36xf32, #tpu.memory_space<smem>>
    %140 = vector.extract_strided_slice %89 {offsets = [1, 2], sizes = [14, 14], strides = [1, 1]} : vector<16x16xf32> to vector<14x14xf32>
    %141 = vector.broadcast %139 : f32 to vector<14x14xf32>
    %142 = arith.mulf %140, %141 : vector<14x14xf32>
    %143 = arith.addf %134, %142 : vector<14x14xf32>
    %c9_i32_51 = arith.constant 9 : i32
    %144 = arith.addi %4, %c9_i32_51 : i32
    %c6_i32_52 = arith.constant 6 : i32
    %145 = arith.addi %144, %c6_i32_52 : i32
    %c0_i32_53 = arith.constant 0 : i32
    %146 = arith.addi %145, %c0_i32_53 : i32
    %147 = arith.index_cast %146 : i32 to index
    %148 = memref.load %arg4[%147] : memref<36xf32, #tpu.memory_space<smem>>
    %149 = vector.extract_strided_slice %89 {offsets = [2, 0], sizes = [14, 14], strides = [1, 1]} : vector<16x16xf32> to vector<14x14xf32>
    %150 = vector.broadcast %148 : f32 to vector<14x14xf32>
    %151 = arith.mulf %149, %150 : vector<14x14xf32>
    %152 = arith.addf %143, %151 : vector<14x14xf32>
    %c9_i32_54 = arith.constant 9 : i32
    %153 = arith.addi %4, %c9_i32_54 : i32
    %c6_i32_55 = arith.constant 6 : i32
    %154 = arith.addi %153, %c6_i32_55 : i32
    %c1_i32_56 = arith.constant 1 : i32
    %155 = arith.addi %154, %c1_i32_56 : i32
    %156 = arith.index_cast %155 : i32 to index
    %157 = memref.load %arg4[%156] : memref<36xf32, #tpu.memory_space<smem>>
    %158 = vector.extract_strided_slice %89 {offsets = [2, 1], sizes = [14, 14], strides = [1, 1]} : vector<16x16xf32> to vector<14x14xf32>
    %159 = vector.broadcast %157 : f32 to vector<14x14xf32>
    %160 = arith.mulf %158, %159 : vector<14x14xf32>
    %161 = arith.addf %152, %160 : vector<14x14xf32>
    %c9_i32_57 = arith.constant 9 : i32
    %162 = arith.addi %4, %c9_i32_57 : i32
    %c6_i32_58 = arith.constant 6 : i32
    %163 = arith.addi %162, %c6_i32_58 : i32
    %c2_i32_59 = arith.constant 2 : i32
    %164 = arith.addi %163, %c2_i32_59 : i32
    %165 = arith.index_cast %164 : i32 to index
    %166 = memref.load %arg4[%165] : memref<36xf32, #tpu.memory_space<smem>>
    %167 = vector.extract_strided_slice %89 {offsets = [2, 2], sizes = [14, 14], strides = [1, 1]} : vector<16x16xf32> to vector<14x14xf32>
    %168 = vector.broadcast %166 : f32 to vector<14x14xf32>
    %169 = arith.mulf %167, %168 : vector<14x14xf32>
    %170 = arith.addf %161, %169 : vector<14x14xf32>
    %c0_60 = arith.constant 0 : index
    %c2 = arith.constant 2 : index
    %c0_61 = arith.constant 0 : index
    %c0_62 = arith.constant 0 : index
    %c0_63 = arith.constant 0 : index
    %171 = vector.load %arg3[%c0_60, %c2, %c0_61, %c0_62, %c0_63] : memref<1x4x1x16x16xf32, #tpu.memory_space<vmem>>, vector<1x1x1x16x16xf32>
    %172 = vector.shape_cast %171 : vector<1x1x1x16x16xf32> to vector<16x16xf32>
    %c18_i32 = arith.constant 18 : i32
    %173 = arith.addi %4, %c18_i32 : i32
    %c0_i32_64 = arith.constant 0 : i32
    %174 = arith.addi %173, %c0_i32_64 : i32
    %c0_i32_65 = arith.constant 0 : i32
    %175 = arith.addi %174, %c0_i32_65 : i32
    %176 = arith.index_cast %175 : i32 to index
    %177 = memref.load %arg4[%176] : memref<36xf32, #tpu.memory_space<smem>>
    %178 = vector.extract_strided_slice %172 {offsets = [0, 0], sizes = [14, 14], strides = [1, 1]} : vector<16x16xf32> to vector<14x14xf32>
    %179 = vector.broadcast %177 : f32 to vector<14x14xf32>
    %180 = arith.mulf %178, %179 : vector<14x14xf32>
    %181 = arith.addf %170, %180 : vector<14x14xf32>
    %c18_i32_66 = arith.constant 18 : i32
    %182 = arith.addi %4, %c18_i32_66 : i32
    %c0_i32_67 = arith.constant 0 : i32
    %183 = arith.addi %182, %c0_i32_67 : i32
    %c1_i32_68 = arith.constant 1 : i32
    %184 = arith.addi %183, %c1_i32_68 : i32
    %185 = arith.index_cast %184 : i32 to index
    %186 = memref.load %arg4[%185] : memref<36xf32, #tpu.memory_space<smem>>
    %187 = vector.extract_strided_slice %172 {offsets = [0, 1], sizes = [14, 14], strides = [1, 1]} : vector<16x16xf32> to vector<14x14xf32>
    %188 = vector.broadcast %186 : f32 to vector<14x14xf32>
    %189 = arith.mulf %187, %188 : vector<14x14xf32>
    %190 = arith.addf %181, %189 : vector<14x14xf32>
    %c18_i32_69 = arith.constant 18 : i32
    %191 = arith.addi %4, %c18_i32_69 : i32
    %c0_i32_70 = arith.constant 0 : i32
    %192 = arith.addi %191, %c0_i32_70 : i32
    %c2_i32_71 = arith.constant 2 : i32
    %193 = arith.addi %192, %c2_i32_71 : i32
    %194 = arith.index_cast %193 : i32 to index
    %195 = memref.load %arg4[%194] : memref<36xf32, #tpu.memory_space<smem>>
    %196 = vector.extract_strided_slice %172 {offsets = [0, 2], sizes = [14, 14], strides = [1, 1]} : vector<16x16xf32> to vector<14x14xf32>
    %197 = vector.broadcast %195 : f32 to vector<14x14xf32>
    %198 = arith.mulf %196, %197 : vector<14x14xf32>
    %199 = arith.addf %190, %198 : vector<14x14xf32>
    %c18_i32_72 = arith.constant 18 : i32
    %200 = arith.addi %4, %c18_i32_72 : i32
    %c3_i32_73 = arith.constant 3 : i32
    %201 = arith.addi %200, %c3_i32_73 : i32
    %c0_i32_74 = arith.constant 0 : i32
    %202 = arith.addi %201, %c0_i32_74 : i32
    %203 = arith.index_cast %202 : i32 to index
    %204 = memref.load %arg4[%203] : memref<36xf32, #tpu.memory_space<smem>>
    %205 = vector.extract_strided_slice %172 {offsets = [1, 0], sizes = [14, 14], strides = [1, 1]} : vector<16x16xf32> to vector<14x14xf32>
    %206 = vector.broadcast %204 : f32 to vector<14x14xf32>
    %207 = arith.mulf %205, %206 : vector<14x14xf32>
    %208 = arith.addf %199, %207 : vector<14x14xf32>
    %c18_i32_75 = arith.constant 18 : i32
    %209 = arith.addi %4, %c18_i32_75 : i32
    %c3_i32_76 = arith.constant 3 : i32
    %210 = arith.addi %209, %c3_i32_76 : i32
    %c1_i32_77 = arith.constant 1 : i32
    %211 = arith.addi %210, %c1_i32_77 : i32
    %212 = arith.index_cast %211 : i32 to index
    %213 = memref.load %arg4[%212] : memref<36xf32, #tpu.memory_space<smem>>
    %214 = vector.extract_strided_slice %172 {offsets = [1, 1], sizes = [14, 14], strides = [1, 1]} : vector<16x16xf32> to vector<14x14xf32>
    %215 = vector.broadcast %213 : f32 to vector<14x14xf32>
    %216 = arith.mulf %214, %215 : vector<14x14xf32>
    %217 = arith.addf %208, %216 : vector<14x14xf32>
    %c18_i32_78 = arith.constant 18 : i32
    %218 = arith.addi %4, %c18_i32_78 : i32
    %c3_i32_79 = arith.constant 3 : i32
    %219 = arith.addi %218, %c3_i32_79 : i32
    %c2_i32_80 = arith.constant 2 : i32
    %220 = arith.addi %219, %c2_i32_80 : i32
    %221 = arith.index_cast %220 : i32 to index
    %222 = memref.load %arg4[%221] : memref<36xf32, #tpu.memory_space<smem>>
    %223 = vector.extract_strided_slice %172 {offsets = [1, 2], sizes = [14, 14], strides = [1, 1]} : vector<16x16xf32> to vector<14x14xf32>
    %224 = vector.broadcast %222 : f32 to vector<14x14xf32>
    %225 = arith.mulf %223, %224 : vector<14x14xf32>
    %226 = arith.addf %217, %225 : vector<14x14xf32>
    %c18_i32_81 = arith.constant 18 : i32
    %227 = arith.addi %4, %c18_i32_81 : i32
    %c6_i32_82 = arith.constant 6 : i32
    %228 = arith.addi %227, %c6_i32_82 : i32
    %c0_i32_83 = arith.constant 0 : i32
    %229 = arith.addi %228, %c0_i32_83 : i32
    %230 = arith.index_cast %229 : i32 to index
    %231 = memref.load %arg4[%230] : memref<36xf32, #tpu.memory_space<smem>>
    %232 = vector.extract_strided_slice %172 {offsets = [2, 0], sizes = [14, 14], strides = [1, 1]} : vector<16x16xf32> to vector<14x14xf32>
    %233 = vector.broadcast %231 : f32 to vector<14x14xf32>
    %234 = arith.mulf %232, %233 : vector<14x14xf32>
    %235 = arith.addf %226, %234 : vector<14x14xf32>
    %c18_i32_84 = arith.constant 18 : i32
    %236 = arith.addi %4, %c18_i32_84 : i32
    %c6_i32_85 = arith.constant 6 : i32
    %237 = arith.addi %236, %c6_i32_85 : i32
    %c1_i32_86 = arith.constant 1 : i32
    %238 = arith.addi %237, %c1_i32_86 : i32
    %239 = arith.index_cast %238 : i32 to index
    %240 = memref.load %arg4[%239] : memref<36xf32, #tpu.memory_space<smem>>
    %241 = vector.extract_strided_slice %172 {offsets = [2, 1], sizes = [14, 14], strides = [1, 1]} : vector<16x16xf32> to vector<14x14xf32>
    %242 = vector.broadcast %240 : f32 to vector<14x14xf32>
    %243 = arith.mulf %241, %242 : vector<14x14xf32>
    %244 = arith.addf %235, %243 : vector<14x14xf32>
    %c18_i32_87 = arith.constant 18 : i32
    %245 = arith.addi %4, %c18_i32_87 : i32
    %c6_i32_88 = arith.constant 6 : i32
    %246 = arith.addi %245, %c6_i32_88 : i32
    %c2_i32_89 = arith.constant 2 : i32
    %247 = arith.addi %246, %c2_i32_89 : i32
    %248 = arith.index_cast %247 : i32 to index
    %249 = memref.load %arg4[%248] : memref<36xf32, #tpu.memory_space<smem>>
    %250 = vector.extract_strided_slice %172 {offsets = [2, 2], sizes = [14, 14], strides = [1, 1]} : vector<16x16xf32> to vector<14x14xf32>
    %251 = vector.broadcast %249 : f32 to vector<14x14xf32>
    %252 = arith.mulf %250, %251 : vector<14x14xf32>
    %253 = arith.addf %244, %252 : vector<14x14xf32>
    %c0_90 = arith.constant 0 : index
    %c3 = arith.constant 3 : index
    %c0_91 = arith.constant 0 : index
    %c0_92 = arith.constant 0 : index
    %c0_93 = arith.constant 0 : index
    %254 = vector.load %arg3[%c0_90, %c3, %c0_91, %c0_92, %c0_93] : memref<1x4x1x16x16xf32, #tpu.memory_space<vmem>>, vector<1x1x1x16x16xf32>
    %255 = vector.shape_cast %254 : vector<1x1x1x16x16xf32> to vector<16x16xf32>
    %c27_i32 = arith.constant 27 : i32
    %256 = arith.addi %4, %c27_i32 : i32
    %c0_i32_94 = arith.constant 0 : i32
    %257 = arith.addi %256, %c0_i32_94 : i32
    %c0_i32_95 = arith.constant 0 : i32
    %258 = arith.addi %257, %c0_i32_95 : i32
    %259 = arith.index_cast %258 : i32 to index
    %260 = memref.load %arg4[%259] : memref<36xf32, #tpu.memory_space<smem>>
    %261 = vector.extract_strided_slice %255 {offsets = [0, 0], sizes = [14, 14], strides = [1, 1]} : vector<16x16xf32> to vector<14x14xf32>
    %262 = vector.broadcast %260 : f32 to vector<14x14xf32>
    %263 = arith.mulf %261, %262 : vector<14x14xf32>
    %264 = arith.addf %253, %263 : vector<14x14xf32>
    %c27_i32_96 = arith.constant 27 : i32
    %265 = arith.addi %4, %c27_i32_96 : i32
    %c0_i32_97 = arith.constant 0 : i32
    %266 = arith.addi %265, %c0_i32_97 : i32
    %c1_i32_98 = arith.constant 1 : i32
    %267 = arith.addi %266, %c1_i32_98 : i32
    %268 = arith.index_cast %267 : i32 to index
    %269 = memref.load %arg4[%268] : memref<36xf32, #tpu.memory_space<smem>>
    %270 = vector.extract_strided_slice %255 {offsets = [0, 1], sizes = [14, 14], strides = [1, 1]} : vector<16x16xf32> to vector<14x14xf32>
    %271 = vector.broadcast %269 : f32 to vector<14x14xf32>
    %272 = arith.mulf %270, %271 : vector<14x14xf32>
    %273 = arith.addf %264, %272 : vector<14x14xf32>
    %c27_i32_99 = arith.constant 27 : i32
    %274 = arith.addi %4, %c27_i32_99 : i32
    %c0_i32_100 = arith.constant 0 : i32
    %275 = arith.addi %274, %c0_i32_100 : i32
    %c2_i32_101 = arith.constant 2 : i32
    %276 = arith.addi %275, %c2_i32_101 : i32
    %277 = arith.index_cast %276 : i32 to index
    %278 = memref.load %arg4[%277] : memref<36xf32, #tpu.memory_space<smem>>
    %279 = vector.extract_strided_slice %255 {offsets = [0, 2], sizes = [14, 14], strides = [1, 1]} : vector<16x16xf32> to vector<14x14xf32>
    %280 = vector.broadcast %278 : f32 to vector<14x14xf32>
    %281 = arith.mulf %279, %280 : vector<14x14xf32>
    %282 = arith.addf %273, %281 : vector<14x14xf32>
    %c27_i32_102 = arith.constant 27 : i32
    %283 = arith.addi %4, %c27_i32_102 : i32
    %c3_i32_103 = arith.constant 3 : i32
    %284 = arith.addi %283, %c3_i32_103 : i32
    %c0_i32_104 = arith.constant 0 : i32
    %285 = arith.addi %284, %c0_i32_104 : i32
    %286 = arith.index_cast %285 : i32 to index
    %287 = memref.load %arg4[%286] : memref<36xf32, #tpu.memory_space<smem>>
    %288 = vector.extract_strided_slice %255 {offsets = [1, 0], sizes = [14, 14], strides = [1, 1]} : vector<16x16xf32> to vector<14x14xf32>
    %289 = vector.broadcast %287 : f32 to vector<14x14xf32>
    %290 = arith.mulf %288, %289 : vector<14x14xf32>
    %291 = arith.addf %282, %290 : vector<14x14xf32>
    %c27_i32_105 = arith.constant 27 : i32
    %292 = arith.addi %4, %c27_i32_105 : i32
    %c3_i32_106 = arith.constant 3 : i32
    %293 = arith.addi %292, %c3_i32_106 : i32
    %c1_i32_107 = arith.constant 1 : i32
    %294 = arith.addi %293, %c1_i32_107 : i32
    %295 = arith.index_cast %294 : i32 to index
    %296 = memref.load %arg4[%295] : memref<36xf32, #tpu.memory_space<smem>>
    %297 = vector.extract_strided_slice %255 {offsets = [1, 1], sizes = [14, 14], strides = [1, 1]} : vector<16x16xf32> to vector<14x14xf32>
    %298 = vector.broadcast %296 : f32 to vector<14x14xf32>
    %299 = arith.mulf %297, %298 : vector<14x14xf32>
    %300 = arith.addf %291, %299 : vector<14x14xf32>
    %c27_i32_108 = arith.constant 27 : i32
    %301 = arith.addi %4, %c27_i32_108 : i32
    %c3_i32_109 = arith.constant 3 : i32
    %302 = arith.addi %301, %c3_i32_109 : i32
    %c2_i32_110 = arith.constant 2 : i32
    %303 = arith.addi %302, %c2_i32_110 : i32
    %304 = arith.index_cast %303 : i32 to index
    %305 = memref.load %arg4[%304] : memref<36xf32, #tpu.memory_space<smem>>
    %306 = vector.extract_strided_slice %255 {offsets = [1, 2], sizes = [14, 14], strides = [1, 1]} : vector<16x16xf32> to vector<14x14xf32>
    %307 = vector.broadcast %305 : f32 to vector<14x14xf32>
    %308 = arith.mulf %306, %307 : vector<14x14xf32>
    %309 = arith.addf %300, %308 : vector<14x14xf32>
    %c27_i32_111 = arith.constant 27 : i32
    %310 = arith.addi %4, %c27_i32_111 : i32
    %c6_i32_112 = arith.constant 6 : i32
    %311 = arith.addi %310, %c6_i32_112 : i32
    %c0_i32_113 = arith.constant 0 : i32
    %312 = arith.addi %311, %c0_i32_113 : i32
    %313 = arith.index_cast %312 : i32 to index
    %314 = memref.load %arg4[%313] : memref<36xf32, #tpu.memory_space<smem>>
    %315 = vector.extract_strided_slice %255 {offsets = [2, 0], sizes = [14, 14], strides = [1, 1]} : vector<16x16xf32> to vector<14x14xf32>
    %316 = vector.broadcast %314 : f32 to vector<14x14xf32>
    %317 = arith.mulf %315, %316 : vector<14x14xf32>
    %318 = arith.addf %309, %317 : vector<14x14xf32>
    %c27_i32_114 = arith.constant 27 : i32
    %319 = arith.addi %4, %c27_i32_114 : i32
    %c6_i32_115 = arith.constant 6 : i32
    %320 = arith.addi %319, %c6_i32_115 : i32
    %c1_i32_116 = arith.constant 1 : i32
    %321 = arith.addi %320, %c1_i32_116 : i32
    %322 = arith.index_cast %321 : i32 to index
    %323 = memref.load %arg4[%322] : memref<36xf32, #tpu.memory_space<smem>>
    %324 = vector.extract_strided_slice %255 {offsets = [2, 1], sizes = [14, 14], strides = [1, 1]} : vector<16x16xf32> to vector<14x14xf32>
    %325 = vector.broadcast %323 : f32 to vector<14x14xf32>
    %326 = arith.mulf %324, %325 : vector<14x14xf32>
    %327 = arith.addf %318, %326 : vector<14x14xf32>
    %c27_i32_117 = arith.constant 27 : i32
    %328 = arith.addi %4, %c27_i32_117 : i32
    %c6_i32_118 = arith.constant 6 : i32
    %329 = arith.addi %328, %c6_i32_118 : i32
    %c2_i32_119 = arith.constant 2 : i32
    %330 = arith.addi %329, %c2_i32_119 : i32
    %331 = arith.index_cast %330 : i32 to index
    %332 = memref.load %arg4[%331] : memref<36xf32, #tpu.memory_space<smem>>
    %333 = vector.extract_strided_slice %255 {offsets = [2, 2], sizes = [14, 14], strides = [1, 1]} : vector<16x16xf32> to vector<14x14xf32>
    %334 = vector.broadcast %332 : f32 to vector<14x14xf32>
    %335 = arith.mulf %333, %334 : vector<14x14xf32>
    %336 = arith.addf %327, %335 : vector<14x14xf32>
    %c0_120 = arith.constant 0 : index
    %c0_121 = arith.constant 0 : index
    %337 = vector.load %arg7[%c0_120, %c0_121] : memref<14x14xf32, #tpu.memory_space<vmem>>, vector<14x14xf32>
    tpu.vector_store %arg7[%c0_120, %c0_121], %336 {strides = array<i32>} : memref<14x14xf32, #tpu.memory_space<vmem>>, vector<14x14xf32>,
    %c0_i32_122 = arith.constant 0 : i32
    %338 = arith.cmpi eq, %arg2, %c0_i32_122 : i32
    %339 = arith.extui %338 : i1 to i32
    %c0_i32_123 = arith.constant 0 : i32
    %340 = arith.cmpi ne, %339, %c0_i32_123 : i32
    scf.if %340 {
      %c0_124 = arith.constant 0 : index
      %341 = memref.load %arg5[%c0_124] : memref<1xf32, #tpu.memory_space<smem>>
      %342 = vector.broadcast %341 : f32 to vector<14x14xf32>
      %343 = arith.addf %336, %342 : vector<14x14xf32>
      %c0_125 = arith.constant 0 : index
      %c0_126 = arith.constant 0 : index
      %c0_127 = arith.constant 0 : index
      %c0_128 = arith.constant 0 : index
      %c0_129 = arith.constant 0 : index
      %344 = vector.load %arg6[%c0_125, %c0_126, %c0_127, %c0_128, %c0_129] : memref<1x1x1x14x14xf32, #tpu.memory_space<vmem>>, vector<1x1x1x14x14xf32>
      %345 = vector.shape_cast %344 : vector<1x1x1x14x14xf32> to vector<14x14xf32>
      %346 = vector.shape_cast %343 : vector<14x14xf32> to vector<1x1x1x14x14xf32>
      tpu.vector_store %arg6[%c0_125, %c0_126, %c0_127, %c0_128, %c0_129], %346 {strides = array<i32>} : memref<1x1x1x14x14xf32, #tpu.memory_space<vmem>>, vector<1x1x1x14x14xf32>,
    } else {
    }
    return
  }
  func.func @transform_0(%arg0: i32, %arg1: i32, %arg2: i32) -> (i32, i32, i32, i32, i32) {
    %c0_i32 = arith.constant 0 : i32
    %c0_i32_0 = arith.constant 0 : i32
    %c0_i32_1 = arith.constant 0 : i32
    return %arg0, %arg2, %arg1, %c0_i32, %c0_i32_0 : i32, i32, i32, i32, i32
  }
  func.func @transform_1(%arg0: i32, %arg1: i32, %arg2: i32) -> i32 {
    %c0_i32 = arith.constant 0 : i32
    %c0_i32_0 = arith.constant 0 : i32
    return %c0_i32 : i32
  }
  func.func @transform_2(%arg0: i32, %arg1: i32, %arg2: i32) -> i32 {
    %c0_i32 = arith.constant 0 : i32
    %c0_i32_0 = arith.constant 0 : i32
    return %c0_i32 : i32
  }
  func.func @transform_3(%arg0: i32, %arg1: i32, %arg2: i32) -> (i32, i32, i32, i32, i32) {
    %c0_i32 = arith.constant 0 : i32
    %c0_i32_0 = arith.constant 0 : i32
    %c0_i32_1 = arith.constant 0 : i32
    %c0_i32_2 = arith.constant 0 : i32
    return %arg0, %c0_i32, %arg1, %c0_i32_0, %c0_i32_1 : i32, i32, i32, i32, i32
  }
}

</mosaic_0001>

<llo_original>
// kernel: tpu_custom_call.1
$region0: #{tpu_custom_call.1}
  #allocation0 [shape = 'u32[]', space=smem, size = 0x4, offset = 0x4, fixed_abs, tag = 'smem constant byte address 0x4 - core index']
  #allocation1 [shape = 'u32[72,128]{1,0:T(1,128)}', space=vmem, size = 0x9000, scoped, tag = 'internal scratch']
  #allocation2 [shape = 'f32[14,14]{1,0:T(8,128)}', space=vmem, size = 0x2000, scoped, tag = 'scratch operand']
  #allocation3 [shape = 'f32[1]{0:T(128)S(6)}', space=smem, size = 0x200, scoped, tag = 'scoped memory for tpu_custom_call.1']
  #allocation8 [shape = 's32[]', space=sflag, size = 0x4, offset = 0, fixed_abs, tag = 'sflag constant byte address 0x0 - dummy sync flag']
  %s0 = inlined_call_operand.hbm [shape: f32[2,4,3,16,16], index: 0, kind: input, shape index: {}]
  %s1 = inlined_call_operand.vmem [shape: f32[36], index: 1, kind: input, shape index: {}]
  %s2 = inlined_call_operand.<no memory space> [shape: f32[1], index: 2, kind: input, shape index: {}]
  %s3 = inlined_call_operand.vmem [shape: f32[2,1,3,14,14], index: 3, kind: output, shape index: {}]
  %s4 = sld [smem:[#allocation0]]
  $region61: #{tpu_custom_call.1} parent=0
    _
  %s6 = ssub.s32 1, %s4
  %s7 = scalar_select 0, %s6, %s4
  %8 = sst [smem:[#allocation3]] %s2
  $region1: #{tpu_custom_call.1} parent=0
    #allocation4 [shape = 'u8[65536]{0}', space=vmem, size = 0x10000, scoped, tag = 'input window, operand 0']
    #allocation5 [shape = 's32[2]{0}', space=sflag, size = 0x8, scoped, tag = 'scoped memory for tpu_custom_call.1']
    #allocation6 [shape = 's32[2]{0}', space=sflag, size = 0x8, scoped, tag = 'scoped memory for tpu_custom_call.1']
    #allocation7 [shape = 'u8[512]{0}', space=smem, size = 0x200, scoped, tag = 'input window, operand 1, single buffered']
    %9 = vsyncpa [#allocation5], 0
    %s10 = scalar_lea.sflag [#allocation5], 1
    %11 = vsyncpa %s10, 0
    %12 = vsyncpa [#allocation6], 0
    loop: start=0, step=1, limit=8
    $region2: #{tpu_custom_call.1} parent=1 // loop_pre_header
      _
    $region3: #{tpu_custom_call.1} parent=1 // loop_header
      %s14 = sphi 0, %s18
      %p15 = scmp.ge.s32.totalorder %s14, 8
      %s21 = sphi 0, %s40
      %s22 = sphi 0, %s36
      %s23 = sphi 0, %s32
      %s24 = sphi 0, %s21
      %s25 = sphi 0, %s22
      %s26 = sphi 0, %s23
      %s27 = sphi 0, %s24
      %s28 = sphi 0, %s25
      %s29 = sphi 0, %s26
      %s47 = sphi 0, %s49
      %s50 = sphi 0, %s47
      %s51 = sphi 0, %s50
      %s67 = sphi 0, %s51
      %s71 = sphi 0, %s71
      %s73 = sphi 0, %s71
      %s74 = sphi 0, %s73
      %s88 = sphi 0, %s74
      %s92 = sphi 0, %s92
      %s94 = sphi 0, %s92
      %s95 = sphi 0, %s94
      %s109 = sphi 0, %s95
      %s117 = sphi 0, %s119
      %s120 = sphi 0, %s117
      %s121 = sphi 0, %s120
      %s137 = sphi 0, %s121
    $region4: #{tpu_custom_call.1} parent=1 // loop_header_branch
      %17 = sbr.rel (%p15) target = $region8
    $region5: #{tpu_custom_call.1} parent=1 // loop_body
      %s19 = ssub.s32 %s14, 1
      %s20 = ssub.s32 %s14, 2
      %s30 = sadd.s32 1, %s23
      %p31 = scmp.ge.s32.totalorder %s30, 1
      %s32 = scalar_select %p31, 0, %s30
      %s33 = sadd.s32 1, %s22
      %s34 = scalar_select %p31, %s33, %s22
      %p35 = scmp.ge.s32.totalorder %s34, 3
      %s36 = scalar_select %p35, 0, %s34
      %s37 = sadd.s32 1, %s21
      %s38 = scalar_select %p35, %s37, %s21
      %p39 = scmp.ge.s32.totalorder %s38, 2
      %s40 = scalar_select %p39, 0, %s38
      %s41 = ssub.s32 %s21, %s40
      %s42 = ssub.s32 %s23, %s32
      %s43 = sor.u32 %s41, %s42
      %s44 = ssub.s32 %s22, %s36
      %s45 = sor.u32 %s43, %s44
      %p46 = scmp.eq.s32.totalorder %s45, 0
      %s48 = sadd.s32 %s47, 1
      %s49 = scalar_select %p46, %s47, %s48
      %p52 = pneg %p46
      %p53 = scmp.eq.s32.totalorder %s14, 5
      %p54 = por %p52, %p53
      %p55 = scmp.ne.s32.totalorder %s47, %s50
      %p56 = scmp.eq.s32.totalorder %s14, 0
      %p57 = por %p55, %p56
      %p58 = scmp.ne.s32.totalorder %s47, %s50
      %p59 = scmp.eq.s32.totalorder %s19, 5
      %p60 = por %p58, %p59
      %p61 = scmp.ne.s32.totalorder %s50, %s51
      %p62 = scmp.eq.s32.totalorder %s19, 0
      %p63 = por %p61, %p62
      %p64 = scmp.ne.s32.totalorder %s50, %s51
      %p65 = scmp.eq.s32.totalorder %s20, 5
      %p66 = por %p64, %p65
      %p68 = scmp.ne.s32.totalorder %s51, %s67
      %p69 = scmp.eq.s32.totalorder %s20, 0
      %p70 = por %p68, %p69
      %s72 = sadd.s32 %s71, 1
      %p75 = scmp.eq.s32.totalorder %s14, 5
      %p76 = scmp.ne.s32.totalorder %s71, %s73
      %p77 = scmp.eq.s32.totalorder %s14, 0
      %p78 = por %p76, %p77
      %p79 = scmp.ne.s32.totalorder %s71, %s73
      %p80 = scmp.eq.s32.totalorder %s19, 5
      %p81 = por %p79, %p80
      %p82 = scmp.ne.s32.totalorder %s73, %s74
      %p83 = scmp.eq.s32.totalorder %s19, 0
      %p84 = por %p82, %p83
      %p85 = scmp.ne.s32.totalorder %s73, %s74
      %p86 = scmp.eq.s32.totalorder %s20, 5
      %p87 = por %p85, %p86
      %p89 = scmp.ne.s32.totalorder %s74, %s88
      %p90 = scmp.eq.s32.totalorder %s20, 0
      %p91 = por %p89, %p90
      %s93 = sadd.s32 %s92, 1
      %p96 = scmp.eq.s32.totalorder %s14, 5
      %p97 = scmp.ne.s32.totalorder %s92, %s94
      %p98 = scmp.eq.s32.totalorder %s14, 0
      %p99 = por %p97, %p98
      %p100 = scmp.ne.s32.totalorder %s92, %s94
      %p101 = scmp.eq.s32.totalorder %s19, 5
      %p102 = por %p100, %p101
      %p103 = scmp.ne.s32.totalorder %s94, %s95
      %p104 = scmp.eq.s32.totalorder %s19, 0
      %p105 = por %p103, %p104
      %p106 = scmp.ne.s32.totalorder %s94, %s95
      %p107 = scmp.eq.s32.totalorder %s20, 5
      %p108 = por %p106, %p107
      %p110 = scmp.ne.s32.totalorder %s95, %s109
      %p111 = scmp.eq.s32.totalorder %s20, 0
      %p112 = por %p110, %p111
      %s113 = ssub.s32 %s21, %s40
      %s114 = ssub.s32 %s22, %s36
      %s115 = sor.u32 %s113, %s114
      %p116 = scmp.eq.s32.totalorder %s115, 0
      %s118 = sadd.s32 %s117, 1
      %s119 = scalar_select %p116, %s117, %s118
      %p122 = pneg %p116
      %p123 = scmp.eq.s32.totalorder %s14, 5
      %p124 = por %p122, %p123
      %p125 = scmp.ne.s32.totalorder %s117, %s120
      %p126 = scmp.eq.s32.totalorder %s14, 0
      %p127 = por %p125, %p126
      %p128 = scmp.ne.s32.totalorder %s117, %s120
      %p129 = scmp.eq.s32.totalorder %s19, 5
      %p130 = por %p128, %p129
      %p131 = scmp.ne.s32.totalorder %s120, %s121
      %p132 = scmp.eq.s32.totalorder %s19, 0
      %p133 = por %p131, %p132
      %p134 = scmp.ne.s32.totalorder %s120, %s121
      %p135 = scmp.eq.s32.totalorder %s20, 5
      %p136 = por %p134, %p135
      %p138 = scmp.ne.s32.totalorder %s121, %s137
      %p139 = scmp.eq.s32.totalorder %s20, 0
      %p140 = por %p138, %p139
      %p141 = scmp.le.s32.totalorder 1, %s14
      %p142 = scmp.lt.s32.totalorder %s14, 7
      %p143 = pnand %p141, %p142
      %p144 = pneg %p143
      // Predicated region
      $region9: #{tpu_custom_call.1} parent=5 // pred_check
        _
      $region10: #{tpu_custom_call.1} parent=5 // pred_check_branch
        %146 = sbr.rel (%p143) target = $region12
      $region11: #{tpu_custom_call.1} parent=5 // pred_region
        %s147 = ssub.s32 %s14, 1
        // Predicated region
        $region13: #{tpu_custom_call.1} parent=11 // pred_check
          %p148 = pneg %p84
        $region14: #{tpu_custom_call.1} parent=11 // pred_check_branch
          %150 = sbr.rel (%p148) target = $region16
        $region15: #{tpu_custom_call.1} parent=11 // pred_region
          %152 = vsyncadd [#allocation6], 0
          %s154 = sshll.u32 %s1, 4
          %s155 = int_to_ptr.vmem [resolvable:$true] %s154
          %157 = dma.vmem_to_smem %s155, 16, [#allocation7], [#allocation6]
        $region16: #{tpu_custom_call.1} parent=11 // pred_fallthru
          _
        // Predicated region
        $region17: #{tpu_custom_call.1} parent=11 // pred_check
          %p158 = pneg %p105
        $region18: #{tpu_custom_call.1} parent=11 // pred_check_branch
          %160 = sbr.rel (%p158) target = $region20
        $region19: #{tpu_custom_call.1} parent=11 // pred_region
          _
        $region20: #{tpu_custom_call.1} parent=11 // pred_fallthru
          _
      $region12: #{tpu_custom_call.1} parent=5 // pred_fallthru
        _
      %p161 = scmp.lt.s32.totalorder %s14, 6
      // Predicated region
      $region21: #{tpu_custom_call.1} parent=5 // pred_check
        %p162 = pneg %p161
      $region22: #{tpu_custom_call.1} parent=5 // pred_check_branch
        %164 = sbr.rel (%p162) target = $region24
      $region23: #{tpu_custom_call.1} parent=5 // pred_region
        // Predicated region
        $region25: #{tpu_custom_call.1} parent=23 // pred_check
          %p165 = pneg %p57
        $region26: #{tpu_custom_call.1} parent=23 // pred_check_branch
          %167 = sbr.rel (%p165) target = $region28
        $region27: #{tpu_custom_call.1} parent=23 // pred_region
          #allocation9 [shape = 'u32[6]{0}', space=smem, size = 0x18, scoped, tag = 'DMA stride descriptor']
          %s168 = sand.u32 %s47, 1
          %s169 = scalar_lea.sflag [#allocation5], %s168
          %s170 = sand.u32 %s47, 1
          %s171 = smul.addr %s170, 64
          %s172 = scalar_lea.vmem [#allocation4], %s171
          %s173 = smul.u32 4, %s23
          %175 = vsyncadd %s169, 0
          %s176 = smul.addr %s22, 2
          %s177 = smul.addr %s173, 6
          %s178 = sadd.s32 %s176, %s177
          %s179 = smul.addr %s21, 24
          %s180 = sadd.s32 %s178, %s179
          %s181 = smul.addr %s180, 8
          %s182 = scalar_lea.hbm %s0, %s181
          %s184 = sshll.u32 1, 14
          %s185 = sxor.u32 4294967295, %s184
          %s187 = sld [smem:[#allocation0]]
          %s188 = sadd.s32 2, %s187
          %s190 = sshll.u32 7, 26
          %s191 = sxor.u32 4294967295, %s190
          %s192 = sand.u32 0, %s191
          %s193 = sshll.u32 %s188, 26
          %s194 = sor.u32 %s192, %s193
          %s195 = sshll.u32 %s182, 4
          %s196 = int_to_ptr.hbm [resolvable:$true] %s195
          %s197 = sshll.u32 %s172, 4
          %s198 = int_to_ptr.vmem [resolvable:$true] %s197
          %204 = sst [smem:[#allocation9]] 768
          %s205 = scalar_lea.smem [#allocation9], 1
          %206 = sst [smem:[%s205]] 256
          %s207 = scalar_lea.smem [#allocation9], 2
          %208 = sst [smem:[%s207]] 2
          %s209 = scalar_lea.smem [#allocation9], 3
          %210 = sst [smem:[%s209]] 128
          %s211 = scalar_lea.smem [#allocation9], 4
          %212 = sst [smem:[%s211]] 128
          %s213 = scalar_lea.smem [#allocation9], 5
          %214 = sst [smem:[%s213]] 8
          %216 = dma.general %s196, 1024, %s198, %s169, [#allocation8], [#allocation9], %s194, 0
        $region28: #{tpu_custom_call.1} parent=23 // pred_fallthru
          _
      $region24: #{tpu_custom_call.1} parent=5 // pred_fallthru
        _
      %p217 = scmp.le.s32.totalorder 1, %s14
      %p218 = scmp.lt.s32.totalorder %s14, 7
      %p219 = pnand %p217, %p218
      %p220 = pneg %p219
      // Predicated region
      $region29: #{tpu_custom_call.1} parent=5 // pred_check
        _
      $region30: #{tpu_custom_call.1} parent=5 // pred_check_branch
        %222 = sbr.rel (%p219) target = $region32
      $region31: #{tpu_custom_call.1} parent=5 // pred_region
        %s223 = ssub.s32 %s14, 1
        %s224 = sand.u32 %s50, 1
        %s225 = scalar_lea.sflag [#allocation5], %s224
        %s226 = sand.u32 %s50, 1
        %s227 = smul.addr %s226, 64
        %s228 = scalar_lea.vmem [#allocation4], %s227
        // Predicated region
        $region33: #{tpu_custom_call.1} parent=31 // pred_check
          %p229 = pneg %p63
        $region34: #{tpu_custom_call.1} parent=31 // pred_check_branch
          %231 = sbr.rel (%p229) target = $region36
        $region35: #{tpu_custom_call.1} parent=31 // pred_region
          %233 = dma.done %s225, 1024
        $region36: #{tpu_custom_call.1} parent=31 // pred_fallthru
          _
        // Predicated region
        $region37: #{tpu_custom_call.1} parent=31 // pred_check
          %p234 = pneg %p84
        $region38: #{tpu_custom_call.1} parent=31 // pred_check_branch
          %236 = sbr.rel (%p234) target = $region40
        $region39: #{tpu_custom_call.1} parent=31 // pred_region
          %238 = dma.done [#allocation6], 16
        $region40: #{tpu_custom_call.1} parent=31 // pred_fallthru
          _
        %239 = sfence
        %s240 = sand.u32 %s50, 1
        %s241 = scalar_lea.sflag [#allocation5], %s240
        %s242 = sand.u32 %s50, 1
        %s243 = smul.addr %s242, 64
        %s244 = scalar_lea.vmem [#allocation4], %s243
        %p245 = pneg %p63
        %p246 = pneg %p60
        %p247 = pneg %p84
        %p248 = pneg %p81
        %p249 = pneg %p105
        %p250 = pneg %p102
        %p251 = pneg %p133
        %p252 = pneg %p130
        %p253 = scmp.lt.s32.totalorder %s24, 1
        %s254 = scalar_select %p253, %s24, 1
        %p255 = scmp.lt.s32.totalorder %s25, 2
        %s256 = scalar_select %p255, %s25, 2
        %s257 = smul.addr %s256, 2
        %s258 = smul.addr %s254, 6
        %s259 = sadd.s32 %s257, %s258
        %s260 = smul.addr %s259, 8
        %s261 = scalar_lea.vmem %s3, %s260
        %s262 = smul.u32 4, %s26
        %p263 = scmp.lt.s32.totalorder %s24, 1
        %s264 = scalar_select %p263, %s24, 1
        %p265 = scmp.lt.s32.totalorder %s25, 2
        %s266 = scalar_select %p265, %s25, 2
        %s267 = smul.addr %s266, 2
        %s268 = smul.addr %s264, 6
        %s269 = sadd.s32 %s267, %s268
        %s270 = smul.addr %s269, 8
        %s271 = scalar_lea.vmem %s3, %s270
        %p272 = scmp.eq.s32.totalorder %s26, 0
        // Predicated region
        $region41: #{tpu_custom_call.1} parent=31 // pred_check
          %p273 = pneg %p272
        $region42: #{tpu_custom_call.1} parent=31 // pred_check_branch
          %275 = sbr.rel (%p273) target = $region44
        $region43: #{tpu_custom_call.1} parent=31 // pred_region
          %vm276 = vcmask 113664
          %277 = vst.msk [vmem:[#allocation2] sm:$0xff] %vm276, 0.0
          %vm278 = vcmask 111616
          %279 = vst.msk [vmem:[#allocation2 + $0x8] sm:$0x3f] %vm278, 0.0
        $region44: #{tpu_custom_call.1} parent=31 // pred_fallthru
          _
        %v280 = vld [vmem:[#allocation2] sm:$0xff]
        %v281 = vld [vmem:[#allocation2 + $0x8] sm:$0x3f]
        %s282 = smul.u32 %s26, 36
        %v283 = vld [vmem:[%s228] sm:$0xff]
        %v284 = vld [vmem:[%s228 + $0x8] sm:$0xff]
        %s285 = sld [smem:[#allocation7 + %s282]]
        %v286 = vstv %s285
        %v287 = vmul.f32 %v283, %v286
        %v288 = vmul.f32 %v284, %v286
        %v289 = vadd.f32 %v280, %v287
        %v290 = vadd.f32 %v281, %v288
        %s291 = sadd.s32 %s282, 1
        %s292 = sld [smem:[#allocation7 + %s291]]
        %v293 = vstv %s292
        %v294 = vmul.f32 %v283, %v293
        %v295 = vmul.f32 %v284, %v293
        %298 = vrot.lane.b32.xlu0 %v294, 127
        %v299 = vpop.permute.xlu0 %298
        %300 = vrot.lane.b32.xlu0 %v295, 127
        %v301 = vpop.permute.xlu0 %300
        %v304 = vadd.f32 %v289, %v299
        %v305 = vadd.f32 %v290, %v301
        %s306 = sadd.s32 %s282, 2
        %s307 = sld [smem:[#allocation7 + %s306]]
        %v308 = vstv %s307
        %v309 = vmul.f32 %v283, %v308
        %v310 = vmul.f32 %v284, %v308
        %313 = vrot.lane.b32.xlu0 %v309, 126
        %v314 = vpop.permute.xlu0 %313
        %315 = vrot.lane.b32.xlu0 %v310, 126
        %v316 = vpop.permute.xlu0 %315
        %v319 = vadd.f32 %v304, %v314
        %v320 = vadd.f32 %v305, %v316
        %s321 = sadd.s32 %s282, 3
        %s322 = sld [smem:[#allocation7 + %s321]]
        %v323 = vstv %s322
        %v324 = vmul.f32 %v283, %v323
        %v325 = vmul.f32 %v284, %v323
        %vm328 = vcmask 1046528
        %v329 = vrot.slane %v324, 1
        %v330 = vrot.slane %v325, 1
        %v331 = vsel %vm328, %v329, %v330
        %v334 = vadd.f32 %v319, %v331
        %v335 = vadd.f32 %v320, %v330
        %s336 = sadd.s32 %s282, 4
        %s337 = sld [smem:[#allocation7 + %s336]]
        %v338 = vstv %s337
        %v339 = vmul.f32 %v283, %v338
        %v340 = vmul.f32 %v284, %v338
        %v343 = vrot.slane %v339, 1
        %v344 = vrot.slane %v340, 1
        %v345 = vsel %vm328, %v343, %v344
        %346 = vrot.lane.b32.xlu0 %v345, 127
        %v347 = vpop.permute.xlu0 %346
        %348 = vrot.lane.b32.xlu0 %v344, 127
        %v349 = vpop.permute.xlu0 %348
        %v352 = vadd.f32 %v334, %v347
        %v353 = vadd.f32 %v335, %v349
        %s354 = sadd.s32 %s282, 5
        %s355 = sld [smem:[#allocation7 + %s354]]
        %v356 = vstv %s355
        %v357 = vmul.f32 %v283, %v356
        %v358 = vmul.f32 %v284, %v356
        %v361 = vrot.slane %v357, 1
        %v362 = vrot.slane %v358, 1
        %v363 = vsel %vm328, %v361, %v362
        %364 = vrot.lane.b32.xlu0 %v363, 126
        %v365 = vpop.permute.xlu0 %364
        %366 = vrot.lane.b32.xlu0 %v362, 126
        %v367 = vpop.permute.xlu0 %366
        %v370 = vadd.f32 %v352, %v365
        %v371 = vadd.f32 %v353, %v367
        %s372 = sadd.s32 %s282, 6
        %s373 = sld [smem:[#allocation7 + %s372]]
        %v374 = vstv %s373
        %v375 = vmul.f32 %v283, %v374
        %v376 = vmul.f32 %v284, %v374
        %vm379 = vcmask 1045504
        %v380 = vrot.slane %v375, 2
        %v381 = vrot.slane %v376, 2
        %v382 = vsel %vm379, %v380, %v381
        %v385 = vadd.f32 %v370, %v382
        %v386 = vadd.f32 %v371, %v381
        %s387 = sadd.s32 %s282, 7
        %s388 = sld [smem:[#allocation7 + %s387]]
        %v389 = vstv %s388
        %v390 = vmul.f32 %v283, %v389
        %v391 = vmul.f32 %v284, %v389
        %v394 = vrot.slane %v390, 2
        %v395 = vrot.slane %v391, 2
        %v396 = vsel %vm379, %v394, %v395
        %397 = vrot.lane.b32.xlu0 %v396, 127
        %v398 = vpop.permute.xlu0 %397
        %399 = vrot.lane.b32.xlu0 %v395, 127
        %v400 = vpop.permute.xlu0 %399
        %v403 = vadd.f32 %v385, %v398
        %v404 = vadd.f32 %v386, %v400
        %s405 = sadd.s32 %s282, 8
        %s406 = sld [smem:[#allocation7 + %s405]]
        %v407 = vstv %s406
        %v408 = vmul.f32 %v283, %v407
        %v409 = vmul.f32 %v284, %v407
        %v412 = vrot.slane %v408, 2
        %v413 = vrot.slane %v409, 2
        %v414 = vsel %vm379, %v412, %v413
        %415 = vrot.lane.b32.xlu0 %v414, 126
        %v416 = vpop.permute.xlu0 %415
        %417 = vrot.lane.b32.xlu0 %v413, 126
        %v418 = vpop.permute.xlu0 %417
        %v421 = vadd.f32 %v403, %v416
        %v422 = vadd.f32 %v404, %v418
        %s423 = scalar_lea.vmem %s228, 16 [#allocation4]
        %v424 = vld [vmem:[%s423] sm:$0xff]
        %v425 = vld [vmem:[%s423 + $0x8] sm:$0xff]
        %s426 = sadd.s32 %s282, 9
        %s427 = sld [smem:[#allocation7 + %s426]]
        %v428 = vstv %s427
        %v429 = vmul.f32 %v424, %v428
        %v430 = vmul.f32 %v425, %v428
        %v431 = vadd.f32 %v421, %v429
        %v432 = vadd.f32 %v422, %v430
        %s433 = sadd.s32 %s282, 10
        %s434 = sld [smem:[#allocation7 + %s433]]
        %v435 = vstv %s434
        %v436 = vmul.f32 %v424, %v435
        %v437 = vmul.f32 %v425, %v435
        %440 = vrot.lane.b32.xlu0 %v436, 127
        %v441 = vpop.permute.xlu0 %440
        %442 = vrot.lane.b32.xlu0 %v437, 127
        %v443 = vpop.permute.xlu0 %442
        %v446 = vadd.f32 %v431, %v441
        %v447 = vadd.f32 %v432, %v443
        %s448 = sadd.s32 %s282, 11
        %s449 = sld [smem:[#allocation7 + %s448]]
        %v450 = vstv %s449
        %v451 = vmul.f32 %v424, %v450
        %v452 = vmul.f32 %v425, %v450
        %455 = vrot.lane.b32.xlu0 %v451, 126
        %v456 = vpop.permute.xlu0 %455
        %457 = vrot.lane.b32.xlu0 %v452, 126
        %v458 = vpop.permute.xlu0 %457
        %v461 = vadd.f32 %v446, %v456
        %v462 = vadd.f32 %v447, %v458
        %s463 = sadd.s32 %s282, 12
        %s464 = sld [smem:[#allocation7 + %s463]]
        %v465 = vstv %s464
        %v466 = vmul.f32 %v424, %v465
        %v467 = vmul.f32 %v425, %v465
        %v470 = vrot.slane %v466, 1
        %v471 = vrot.slane %v467, 1
        %v472 = vsel %vm328, %v470, %v471
        %v475 = vadd.f32 %v461, %v472
        %v476 = vadd.f32 %v462, %v471
        %s477 = sadd.s32 %s282, 13
        %s478 = sld [smem:[#allocation7 + %s477]]
        %v479 = vstv %s478
        %v480 = vmul.f32 %v424, %v479
        %v481 = vmul.f32 %v425, %v479
        %v484 = vrot.slane %v480, 1
        %v485 = vrot.slane %v481, 1
        %v486 = vsel %vm328, %v484, %v485
        %487 = vrot.lane.b32.xlu0 %v486, 127
        %v488 = vpop.permute.xlu0 %487
        %489 = vrot.lane.b32.xlu0 %v485, 127
        %v490 = vpop.permute.xlu0 %489
        %v493 = vadd.f32 %v475, %v488
        %v494 = vadd.f32 %v476, %v490
        %s495 = sadd.s32 %s282, 14
        %s496 = sld [smem:[#allocation7 + %s495]]
        %v497 = vstv %s496
        %v498 = vmul.f32 %v424, %v497
        %v499 = vmul.f32 %v425, %v497
        %v502 = vrot.slane %v498, 1
        %v503 = vrot.slane %v499, 1
        %v504 = vsel %vm328, %v502, %v503
        %505 = vrot.lane.b32.xlu0 %v504, 126
        %v506 = vpop.permute.xlu0 %505
        %507 = vrot.lane.b32.xlu0 %v503, 126
        %v508 = vpop.permute.xlu0 %507
        %v511 = vadd.f32 %v493, %v506
        %v512 = vadd.f32 %v494, %v508
        %s513 = sadd.s32 %s282, 15
        %s514 = sld [smem:[#allocation7 + %s513]]
        %v515 = vstv %s514
        %v516 = vmul.f32 %v424, %v515
        %v517 = vmul.f32 %v425, %v515
        %v520 = vrot.slane %v516, 2
        %v521 = vrot.slane %v517, 2
        %v522 = vsel %vm379, %v520, %v521
        %v525 = vadd.f32 %v511, %v522
        %v526 = vadd.f32 %v512, %v521
        %s527 = sadd.s32 %s282, 16
        %s528 = sld [smem:[#allocation7 + %s527]]
        %v529 = vstv %s528
        %v530 = vmul.f32 %v424, %v529
        %v531 = vmul.f32 %v425, %v529
        %v534 = vrot.slane %v530, 2
        %v535 = vrot.slane %v531, 2
        %v536 = vsel %vm379, %v534, %v535
        %537 = vrot.lane.b32.xlu0 %v536, 127
        %v538 = vpop.permute.xlu0 %537
        %539 = vrot.lane.b32.xlu0 %v535, 127
        %v540 = vpop.permute.xlu0 %539
        %v543 = vadd.f32 %v525, %v538
        %v544 = vadd.f32 %v526, %v540
        %s545 = sadd.s32 %s282, 17
        %s546 = sld [smem:[#allocation7 + %s545]]
        %v547 = vstv %s546
        %v548 = vmul.f32 %v424, %v547
        %v549 = vmul.f32 %v425, %v547
        %v552 = vrot.slane %v548, 2
        %v553 = vrot.slane %v549, 2
        %v554 = vsel %vm379, %v552, %v553
        %555 = vrot.lane.b32.xlu0 %v554, 126
        %v556 = vpop.permute.xlu0 %555
        %557 = vrot.lane.b32.xlu0 %v553, 126
        %v558 = vpop.permute.xlu0 %557
        %v561 = vadd.f32 %v543, %v556
        %v562 = vadd.f32 %v544, %v558
        %s563 = scalar_lea.vmem %s228, 32 [#allocation4]
        %v564 = vld [vmem:[%s563] sm:$0xff]
        %v565 = vld [vmem:[%s563 + $0x8] sm:$0xff]
        %s566 = sadd.s32 %s282, 18
        %s567 = sld [smem:[#allocation7 + %s566]]
        %v568 = vstv %s567
        %v569 = vmul.f32 %v564, %v568
        %v570 = vmul.f32 %v565, %v568
        %v571 = vadd.f32 %v561, %v569
        %v572 = vadd.f32 %v562, %v570
        %s573 = sadd.s32 %s282, 19
        %s574 = sld [smem:[#allocation7 + %s573]]
        %v575 = vstv %s574
        %v576 = vmul.f32 %v564, %v575
        %v577 = vmul.f32 %v565, %v575
        %580 = vrot.lane.b32.xlu0 %v576, 127
        %v581 = vpop.permute.xlu0 %580
        %582 = vrot.lane.b32.xlu0 %v577, 127
        %v583 = vpop.permute.xlu0 %582
        %v586 = vadd.f32 %v571, %v581
        %v587 = vadd.f32 %v572, %v583
        %s588 = sadd.s32 %s282, 20
        %s589 = sld [smem:[#allocation7 + %s588]]
        %v590 = vstv %s589
        %v591 = vmul.f32 %v564, %v590
        %v592 = vmul.f32 %v565, %v590
        %595 = vrot.lane.b32.xlu0 %v591, 126
        %v596 = vpop.permute.xlu0 %595
        %597 = vrot.lane.b32.xlu0 %v592, 126
        %v598 = vpop.permute.xlu0 %597
        %v601 = vadd.f32 %v586, %v596
        %v602 = vadd.f32 %v587, %v598
        %s603 = sadd.s32 %s282, 21
        %s604 = sld [smem:[#allocation7 + %s603]]
        %v605 = vstv %s604
        %v606 = vmul.f32 %v564, %v605
        %v607 = vmul.f32 %v565, %v605
        %v610 = vrot.slane %v606, 1
        %v611 = vrot.slane %v607, 1
        %v612 = vsel %vm328, %v610, %v611
        %v615 = vadd.f32 %v601, %v612
        %v616 = vadd.f32 %v602, %v611
        %s617 = sadd.s32 %s282, 22
        %s618 = sld [smem:[#allocation7 + %s617]]
        %v619 = vstv %s618
        %v620 = vmul.f32 %v564, %v619
        %v621 = vmul.f32 %v565, %v619
        %v624 = vrot.slane %v620, 1
        %v625 = vrot.slane %v621, 1
        %v626 = vsel %vm328, %v624, %v625
        %627 = vrot.lane.b32.xlu0 %v626, 127
        %v628 = vpop.permute.xlu0 %627
        %629 = vrot.lane.b32.xlu0 %v625, 127
        %v630 = vpop.permute.xlu0 %629
        %v633 = vadd.f32 %v615, %v628
        %v634 = vadd.f32 %v616, %v630
        %s635 = sadd.s32 %s282, 23
        %s636 = sld [smem:[#allocation7 + %s635]]
        %v637 = vstv %s636
        %v638 = vmul.f32 %v564, %v637
        %v639 = vmul.f32 %v565, %v637
        %v642 = vrot.slane %v638, 1
        %v643 = vrot.slane %v639, 1
        %v644 = vsel %vm328, %v642, %v643
        %645 = vrot.lane.b32.xlu0 %v644, 126
        %v646 = vpop.permute.xlu0 %645
        %647 = vrot.lane.b32.xlu0 %v643, 126
        %v648 = vpop.permute.xlu0 %647
        %v651 = vadd.f32 %v633, %v646
        %v652 = vadd.f32 %v634, %v648
        %s653 = sadd.s32 %s282, 24
        %s654 = sld [smem:[#allocation7 + %s653]]
        %v655 = vstv %s654
        %v656 = vmul.f32 %v564, %v655
        %v657 = vmul.f32 %v565, %v655
        %v660 = vrot.slane %v656, 2
        %v661 = vrot.slane %v657, 2
        %v662 = vsel %vm379, %v660, %v661
        %v665 = vadd.f32 %v651, %v662
        %v666 = vadd.f32 %v652, %v661
        %s667 = sadd.s32 %s282, 25
        %s668 = sld [smem:[#allocation7 + %s667]]
        %v669 = vstv %s668
        %v670 = vmul.f32 %v564, %v669
        %v671 = vmul.f32 %v565, %v669
        %v674 = vrot.slane %v670, 2
        %v675 = vrot.slane %v671, 2
        %v676 = vsel %vm379, %v674, %v675
        %677 = vrot.lane.b32.xlu0 %v676, 127
        %v678 = vpop.permute.xlu0 %677
        %679 = vrot.lane.b32.xlu0 %v675, 127
        %v680 = vpop.permute.xlu0 %679
        %v683 = vadd.f32 %v665, %v678
        %v684 = vadd.f32 %v666, %v680
        %s685 = sadd.s32 %s282, 26
        %s686 = sld [smem:[#allocation7 + %s685]]
        %v687 = vstv %s686
        %v688 = vmul.f32 %v564, %v687
        %v689 = vmul.f32 %v565, %v687
        %v692 = vrot.slane %v688, 2
        %v693 = vrot.slane %v689, 2
        %v694 = vsel %vm379, %v692, %v693
        %695 = vrot.lane.b32.xlu0 %v694, 126
        %v696 = vpop.permute.xlu0 %695
        %697 = vrot.lane.b32.xlu0 %v693, 126
        %v698 = vpop.permute.xlu0 %697
        %v701 = vadd.f32 %v683, %v696
        %v702 = vadd.f32 %v684, %v698
        %s703 = scalar_lea.vmem %s228, 48 [#allocation4]
        %v704 = vld [vmem:[%s703] sm:$0xff]
        %v705 = vld [vmem:[%s703 + $0x8] sm:$0xff]
        %s706 = sadd.s32 %s282, 27
        %s707 = sld [smem:[#allocation7 + %s706]]
        %v708 = vstv %s707
        %v709 = vmul.f32 %v704, %v708
        %v710 = vmul.f32 %v705, %v708
        %v711 = vadd.f32 %v701, %v709
        %v712 = vadd.f32 %v702, %v710
        %s713 = sadd.s32 %s282, 28
        %s714 = sld [smem:[#allocation7 + %s713]]
        %v715 = vstv %s714
        %v716 = vmul.f32 %v704, %v715
        %v717 = vmul.f32 %v705, %v715
        %720 = vrot.lane.b32.xlu0 %v716, 127
        %v721 = vpop.permute.xlu0 %720
        %722 = vrot.lane.b32.xlu0 %v717, 127
        %v723 = vpop.permute.xlu0 %722
        %v726 = vadd.f32 %v711, %v721
        %v727 = vadd.f32 %v712, %v723
        %s728 = sadd.s32 %s282, 29
        %s729 = sld [smem:[#allocation7 + %s728]]
        %v730 = vstv %s729
        %v731 = vmul.f32 %v704, %v730
        %v732 = vmul.f32 %v705, %v730
        %735 = vrot.lane.b32.xlu0 %v731, 126
        %v736 = vpop.permute.xlu0 %735
        %737 = vrot.lane.b32.xlu0 %v732, 126
        %v738 = vpop.permute.xlu0 %737
        %v741 = vadd.f32 %v726, %v736
        %v742 = vadd.f32 %v727, %v738
        %s743 = sadd.s32 %s282, 30
        %s744 = sld [smem:[#allocation7 + %s743]]
        %v745 = vstv %s744
        %v746 = vmul.f32 %v704, %v745
        %v747 = vmul.f32 %v705, %v745
        %v750 = vrot.slane %v746, 1
        %v751 = vrot.slane %v747, 1
        %v752 = vsel %vm328, %v750, %v751
        %v755 = vadd.f32 %v741, %v752
        %v756 = vadd.f32 %v742, %v751
        %s757 = sadd.s32 %s282, 31
        %s758 = sld [smem:[#allocation7 + %s757]]
        %v759 = vstv %s758
        %v760 = vmul.f32 %v704, %v759
        %v761 = vmul.f32 %v705, %v759
        %v764 = vrot.slane %v760, 1
        %v765 = vrot.slane %v761, 1
        %v766 = vsel %vm328, %v764, %v765
        %767 = vrot.lane.b32.xlu0 %v766, 127
        %v768 = vpop.permute.xlu0 %767
        %769 = vrot.lane.b32.xlu0 %v765, 127
        %v770 = vpop.permute.xlu0 %769
        %v773 = vadd.f32 %v755, %v768
        %v774 = vadd.f32 %v756, %v770
        %s775 = sadd.s32 %s282, 32
        %s776 = sld [smem:[#allocation7 + %s775]]
        %v777 = vstv %s776
        %v778 = vmul.f32 %v704, %v777
        %v779 = vmul.f32 %v705, %v777
        %v782 = vrot.slane %v778, 1
        %v783 = vrot.slane %v779, 1
        %v784 = vsel %vm328, %v782, %v783
        %785 = vrot.lane.b32.xlu0 %v784, 126
        %v786 = vpop.permute.xlu0 %785
        %787 = vrot.lane.b32.xlu0 %v783, 126
        %v788 = vpop.permute.xlu0 %787
        %v791 = vadd.f32 %v773, %v786
        %v792 = vadd.f32 %v774, %v788
        %s793 = sadd.s32 %s282, 33
        %s794 = sld [smem:[#allocation7 + %s793]]
        %v795 = vstv %s794
        %v796 = vmul.f32 %v704, %v795
        %v797 = vmul.f32 %v705, %v795
        %v800 = vrot.slane %v796, 2
        %v801 = vrot.slane %v797, 2
        %v802 = vsel %vm379, %v800, %v801
        %v805 = vadd.f32 %v791, %v802
        %v806 = vadd.f32 %v792, %v801
        %s807 = sadd.s32 %s282, 34
        %s808 = sld [smem:[#allocation7 + %s807]]
        %v809 = vstv %s808
        %v810 = vmul.f32 %v704, %v809
        %v811 = vmul.f32 %v705, %v809
        %v814 = vrot.slane %v810, 2
        %v815 = vrot.slane %v811, 2
        %v816 = vsel %vm379, %v814, %v815
        %817 = vrot.lane.b32.xlu0 %v816, 127
        %v818 = vpop.permute.xlu0 %817
        %819 = vrot.lane.b32.xlu0 %v815, 127
        %v820 = vpop.permute.xlu0 %819
        %v823 = vadd.f32 %v805, %v818
        %v824 = vadd.f32 %v806, %v820
        %s825 = sadd.s32 %s282, 35
        %s826 = sld [smem:[#allocation7 + %s825]]
        %v827 = vstv %s826
        %v828 = vmul.f32 %v704, %v827
        %v829 = vmul.f32 %v705, %v827
        %v832 = vrot.slane %v828, 2
        %v833 = vrot.slane %v829, 2
        %v834 = vsel %vm379, %v832, %v833
        %835 = vrot.lane.b32.xlu0 %v834, 126
        %v836 = vpop.permute.xlu0 %835
        %837 = vrot.lane.b32.xlu0 %v833, 126
        %v838 = vpop.permute.xlu0 %837
        %v841 = vadd.f32 %v823, %v836
        %v842 = vadd.f32 %v824, %v838
        %vm843 = vcmask 113664
        %844 = vst.msk [vmem:[#allocation2] sm:$0xff] %vm843, %v841
        %vm845 = vcmask 111616
        %846 = vst.msk [vmem:[#allocation2 + $0x8] sm:$0x3f] %vm845, %v842
        // Predicated region
        $region45: #{tpu_custom_call.1} parent=31 // pred_check
          %p847 = pneg %p272
        $region46: #{tpu_custom_call.1} parent=31 // pred_check_branch
          %849 = sbr.rel (%p847) target = $region48
        $region47: #{tpu_custom_call.1} parent=31 // pred_region
          %s850 = sld [smem:[#allocation3]]
          %v851 = vstv %s850
          %v852 = vadd.f32 %v841, %v851
          %v853 = vadd.f32 %v842, %v851
          %854 = vst.msk [vmem:[%s271] sm:$0xff] %vm843, %v852
          %855 = vst.msk [vmem:[%s271 + $0x8] sm:$0x3f] %vm845, %v853
        $region48: #{tpu_custom_call.1} parent=31 // pred_fallthru
          _
        %p856 = scmp.lt.s32.totalorder %s24, 1
        %s857 = scalar_select %p856, %s24, 1
        %p858 = scmp.lt.s32.totalorder %s25, 2
        %s859 = scalar_select %p858, %s25, 2
        %s860 = smul.addr %s859, 2
        %s861 = smul.addr %s857, 6
        %s862 = sadd.s32 %s860, %s861
        %s863 = smul.addr %s862, 8
        %s864 = scalar_lea.vmem %s3, %s863
        // Predicated region
        $region49: #{tpu_custom_call.1} parent=31 // pred_check
          %p865 = pneg %p130
        $region50: #{tpu_custom_call.1} parent=31 // pred_check_branch
          %867 = sbr.rel (%p865) target = $region52
        $region51: #{tpu_custom_call.1} parent=31 // pred_region
          _
        $region52: #{tpu_custom_call.1} parent=31 // pred_fallthru
          _
      $region32: #{tpu_custom_call.1} parent=5 // pred_fallthru
        _
      %p868 = scmp.le.s32.totalorder 2, %s14
      // Predicated region
      $region53: #{tpu_custom_call.1} parent=5 // pred_check
        %p869 = pneg %p868
      $region54: #{tpu_custom_call.1} parent=5 // pred_check_branch
        %871 = sbr.rel (%p869) target = $region56
      $region55: #{tpu_custom_call.1} parent=5 // pred_region
        %s872 = ssub.s32 %s14, 2
        // Predicated region
        $region57: #{tpu_custom_call.1} parent=55 // pred_check
          %p873 = pneg %p136
        $region58: #{tpu_custom_call.1} parent=55 // pred_check_branch
          %875 = sbr.rel (%p873) target = $region60
        $region59: #{tpu_custom_call.1} parent=55 // pred_region
          %p876 = scmp.lt.s32.totalorder %s27, 1
          %s877 = scalar_select %p876, %s27, 1
          %p878 = scmp.lt.s32.totalorder %s28, 2
          %s879 = scalar_select %p878, %s28, 2
          %s880 = smul.addr %s879, 2
          %s881 = smul.addr %s877, 6
          %s882 = sadd.s32 %s880, %s881
          %s883 = smul.addr %s882, 8
          %s884 = scalar_lea.vmem %s3, %s883
        $region60: #{tpu_custom_call.1} parent=55 // pred_fallthru
          _
      $region56: #{tpu_custom_call.1} parent=5 // pred_fallthru
        _
    $region6: #{tpu_custom_call.1} parent=1 // loop_footer
      %s18 = sadd.s32 1, %s14
    $region7: #{tpu_custom_call.1} parent=1 // loop_footer_branch
      %13 = sbr.rel target = $region3
    $region8: #{tpu_custom_call.1} parent=1 // loop_exit
      _
    %885 = vsyncpa [#allocation5], 1
    %s886 = scalar_lea.sflag [#allocation5], 1
    %887 = vsyncpa %s886, 1
    %888 = vsyncpa [#allocation6], 1
    %s889 = scalar_lea.sflag [#allocation6], 1
    %890 = vsyncpa %s889, 1

</llo_original>
